<compile_context>
chip_gen: v5e
topology: v5e:2x2
jax: 0.10.0
libtpu: 0.0.40
codegen_flags: <defaults>
</compile_context>

<pallas_src>
import functools

import jax
import jax.numpy as jnp
from jax.experimental import pallas as pl
from jax.experimental.pallas import tpu as pltpu


def _round_up(n: int, m: int) -> int:
    return (n + m - 1) // m * m


def _cdiv(a: int, b: int) -> int:
    return (a + b - 1) // b


def _tpu_hw():
    """(vmem_capacity_bytes, feature_alignment) for the current TPU."""
    vmem_cap = 64 * 1024 * 1024          # conservative default (v7x per-core)
    align = 128                          # 128x128 MXU (v5e and older)
    try:
        vmem_cap = int(pltpu.get_tpu_info().vmem_capacity_bytes)
    except Exception:
        pass
    try:
        kind = jax.devices()[0].device_kind.lower()
        if any(tag in kind for tag in ("v6", "v7", "tpu7")):
            align = 256                  # 256x256 MXU generations
    except Exception:
        pass
    return vmem_cap, align


def _ffn_kernel(x_ref, w1_ref, b1_ref, w2_ref, b2_ref, o_ref, acc_ref):
    """One (token-tile, hidden-chunk) step of Linear -> GELU -> Linear."""
    k = pl.program_id(1)

    @pl.when(k == 0)
    def _():
        acc_ref[...] = jnp.zeros_like(acc_ref)

    # First linear: MXU matmul in the compute dtype, f32 accumulation.
    h = jnp.dot(x_ref[...], w1_ref[...], preferred_element_type=jnp.float32)
    h = h + b1_ref[...].astype(jnp.float32)       # (1, TH) row broadcasts

    # GELU (tanh approximation) in f32: tanh rides the EUP slot, the
    # polynomial mults ride the VALU under MXU slack.
    c = jnp.float32(0.7978845608028654)           # sqrt(2/pi)
    h = 0.5 * h * (1.0 + jnp.tanh(c * (h + 0.044715 * (h * h) * h)))

    # Second linear: cast back to the weight dtype (bf16 weights -> bf16 MXU
    # matmul) and accumulate into the f32 scratch across hidden chunks.
    acc_ref[...] += jnp.dot(h.astype(w2_ref.dtype), w2_ref[...],
                            preferred_element_type=jnp.float32)

    @pl.when(k == pl.num_programs(1) - 1)
    def _():
        o_ref[...] = (acc_ref[...]
                      + b2_ref[...].astype(jnp.float32)).astype(o_ref.dtype)


def feed_forward(x, w1, b1, w2, b2, *, tile_tokens=None, compute_dtype=None):
    """x: (B, T, D) -> (B, T, D). Token-wise Linear(D,H) -> GELU -> Linear(H,D).

    compute_dtype: dtype used for the MXU operands (e.g. jnp.bfloat16 for ~3x
    MXU throughput when the caller holds f32); accumulation is always f32.
    """
    B, T, D = x.shape
    H = w1.shape[1]
    tokens = B * T
    out_dtype = x.dtype
    compute = jnp.dtype(compute_dtype) if compute_dtype is not None else jnp.dtype(x.dtype)

    vmem_cap, align = _tpu_hw()
    vmem_budget = max(min(int(0.8 * vmem_cap), vmem_cap - 8 * 1024 * 1024),
                      16 * 1024 * 1024)

    # Feature dims zero-padded to the MXU tile width: lane-dense stores, full
    # MXU passes; padded inputs/hidden units contribute exactly zero.
    D_pad = _round_up(D, align)
    H_al = _round_up(H, align)

    # --- token tile ---------------------------------------------------------
    if tile_tokens is None:
        tile_tokens = 1024 if vmem_budget >= 80 * 1024 * 1024 else 512
    min_tiles = 2 if tokens >= 16 else 1      # keep both v7x TensorCores busy
    n_tok = max(_cdiv(tokens, tile_tokens), min_tiles)
    TM = _round_up(_cdiv(tokens, n_tok), 8)

    # --- hidden chunking fallback (only when it doesn't fit VMEM) ------------
    w_isz = compute.itemsize
    o_isz = jnp.dtype(out_dtype).itemsize
    b_isz = jnp.dtype(b2.dtype).itemsize

    def _footprint(tm, th, n_h):
        w_buf = 1 if n_h == 1 else 2          # resident weights single-buffer
        return (2 * tm * D_pad * w_isz        # x tile (double-buffered)
                + 2 * tm * D_pad * o_isz      # out tile (double-buffered)
                + w_buf * D_pad * th * w_isz  # w1 chunk
                + w_buf * th * w_isz          # b1 chunk
                + w_buf * th * D_pad * w_isz  # w2 chunk
                + D_pad * b_isz               # b2 (resident)
                + tm * D_pad * 4              # f32 accumulator scratch
                + tm * th * 4                 # f32 hidden activations
                + tm * th * w_isz)            # hidden cast for 2nd matmul

    max_h_tiles = max(1, H_al // align)
    while True:
        n_h = 1
        while (n_h < max_h_tiles
               and _footprint(TM, _round_up(_cdiv(H_al, n_h), align), n_h)
               > vmem_budget):
            n_h += 1
        TH = _round_up(_cdiv(H_al, n_h), align)
        if _footprint(TM, TH, n_h) <= vmem_budget or TM <= 8:
            break
        TM = max(8, _round_up(TM // 2, 8))    # fully H-tiled and still too big

    H_pad = n_h * TH
    n_tok = max(_cdiv(tokens, TM), min_tiles)
    tokens_pad = n_tok * TM

    # --- operand prep (skip pads / casts that are no-ops) --------------------
    x2d = x.reshape(tokens, D)
    if x2d.dtype != compute:
        x2d = x2d.astype(compute)
    if (tokens_pad, D_pad) != (tokens, D):
        x2d = jnp.pad(x2d, ((0, tokens_pad - tokens), (0, D_pad - D)))

    w1p = w1.astype(compute) if w1.dtype != compute else w1
    if w1p.shape != (D_pad, H_pad):
        w1p = jnp.pad(w1p, ((0, D_pad - D), (0, H_pad - H)))
    w2p = w2.astype(compute) if w2.dtype != compute else w2
    if w2p.shape != (H_pad, D_pad):
        w2p = jnp.pad(w2p, ((0, H_pad - H), (0, D_pad - D)))
    b1p = (b1 if H_pad == H else jnp.pad(b1, (0, H_pad - H))).reshape(1, H_pad)
    b2p = (b2 if D_pad == D else jnp.pad(b2, (0, D_pad - D))).reshape(1, D_pad)

    fp = _footprint(TM, TH, n_h)
    vmem_limit = vmem_budget if fp <= vmem_budget else min(int(fp * 1.2), vmem_cap)

    cost = pl.CostEstimate(
        flops=2 * 2 * tokens_pad * D_pad * H_pad,          # two matmuls
        transcendentals=tokens_pad * H_pad,                # tanh in GELU
        bytes_accessed=((x2d.size + w1p.size + w2p.size) * w_isz
                        + (b1p.size + b2p.size) * b_isz
                        + tokens_pad * D_pad * o_isz),
    )

    resident = pl.Buffered(1)                  # constant index_map -> 1 buffer
    w_mode = resident if n_h == 1 else None    # H-chunked weights need 2 bufs

    def _spec(shape, imap, mode):
        if mode is None:
            return pl.BlockSpec(shape, imap)
        return pl.BlockSpec(shape, imap, pipeline_mode=mode)

    out = pl.pallas_call(
        _ffn_kernel,
        out_shape=jax.ShapeDtypeStruct((tokens_pad, D_pad), out_dtype),
        grid_spec=pltpu.PrefetchScalarGridSpec(
            num_scalar_prefetch=0,
            grid=(n_tok, n_h),
            in_specs=[
                _spec((TM, D_pad), lambda i, k: (i, 0), None),      # x tile
                _spec((D_pad, TH), lambda i, k: (0, k), w_mode),    # w1
                _spec((1, TH), lambda i, k: (0, k), w_mode),        # b1
                _spec((TH, D_pad), lambda i, k: (k, 0), w_mode),    # w2
                _spec((1, D_pad), lambda i, k: (0, 0), resident),   # b2
            ],
            out_specs=pl.BlockSpec((TM, D_pad), lambda i, k: (i, 0)),
            scratch_shapes=[pltpu.VMEM((TM, D_pad), jnp.float32)],
        ),
        compiler_params=pltpu.CompilerParams(
            dimension_semantics=("parallel", "arbitrary"),
            vmem_limit_bytes=int(vmem_limit),
        ),
        cost_estimate=cost,
    )(x2d, w1p, b1p, w2p, b2p)

    return out[:tokens, :D].reshape(B, T, D)


def _reference(x, w1, b1, w2, b2):
    h = jnp.einsum("btd,dh->bth", x.astype(jnp.float32),
                   w1.astype(jnp.float32)) + b1.astype(jnp.float32)
    c = 0.7978845608028654
    h = 0.5 * h * (1.0 + jnp.tanh(c * (h + 0.044715 * h ** 3)))
    y = jnp.einsum("bth,hd->btd", h, w2.astype(jnp.float32)) + b2.astype(jnp.float32)
    return y.astype(x.dtype)


if __name__ == "__main__":
    B, T, D, H = 2, 8, 32, 64

    key = jax.random.PRNGKey(0)
    kx, kw1, kb1, kw2, kb2 = jax.random.split(key, 5)

    x = jax.random.normal(kx, (B, T, D), dtype=jnp.float32)
    # Deterministic synthetic parameters (base class leaves `self.net` abstract).
    w1 = jax.random.normal(kw1, (D, H), dtype=jnp.float32) * (1.0 / D ** 0.5)
    b1 = jax.random.normal(kb1, (H,), dtype=jnp.float32) * 0.01
    w2 = jax.random.normal(kw2, (H, D), dtype=jnp.float32) * (1.0 / H ** 0.5)
    b2 = jax.random.normal(kb2, (D,), dtype=jnp.float32) * 0.01

    ref = _reference(x, w1, b1, w2, b2)

    # f32 path (bit-for-bit same math as before; tight tolerance).
    ffn_f32 = jax.jit(feed_forward)
    out = jax.block_until_ready(ffn_f32(x, w1, b1, w2, b2))
    assert out.shape == (B, T, D) and out.dtype == x.dtype
    assert jnp.allclose(out, ref, atol=1e-4, rtol=1e-4)

    # bf16-MXU fast path (f32 accumulation; looser tolerance vs f32 reference).
    ffn_bf16 = jax.jit(functools.partial(feed_forward,
                                         compute_dtype=jnp.bfloat16))
    out_bf16 = jax.block_until_ready(ffn_bf16(x, w1, b1, w2, b2))
    assert out_bf16.shape == (B, T, D) and out_bf16.dtype == x.dtype
    assert jnp.allclose(out_bf16, ref, atol=5e-2, rtol=5e-2)

    print("KERNEL_OK")
</pallas_src>

<mosaic_0001>
module attributes {stable_mosaic.version = 11 : i64} {
  func.func @_ffn_kernel(%arg0: i32, %arg1: i32, %arg2: memref<8x128xf32, #tpu.memory_space<vmem>>, %arg3: memref<128x128xf32, #tpu.memory_space<vmem>>, %arg4: memref<1x128xf32, #tpu.memory_space<vmem>>, %arg5: memref<128x128xf32, #tpu.memory_space<vmem>>, %arg6: memref<1x128xf32, #tpu.memory_space<vmem>>, %arg7: memref<8x128xf32, #tpu.memory_space<vmem>>, %arg8: memref<8x128xf32, #tpu.memory_space<vmem>>) attributes {dimension_semantics = [#tpu.dimension_semantics<parallel>, #tpu.dimension_semantics<arbitrary>], iteration_bounds = array<i64: 2, 1>, scalar_prefetch = 0 : i64, scratch_operands = 1 : i64, tpu.core_type = #tpu.core_type<tc>, window_params = [{transform_indices = @transform_0, window_bounds = array<i64: 8, 128>}, {pipeline_mode = #tpu.pipeline_mode<synchronous>, transform_indices = @transform_1, window_bounds = array<i64: 128, 128>}, {pipeline_mode = #tpu.pipeline_mode<synchronous>, transform_indices = @transform_2, window_bounds = array<i64: 1, 128>}, {pipeline_mode = #tpu.pipeline_mode<synchronous>, transform_indices = @transform_3, window_bounds = array<i64: 128, 128>}, {pipeline_mode = #tpu.pipeline_mode<synchronous>, transform_indices = @transform_4, window_bounds = array<i64: 1, 128>}, {transform_indices = @transform_5, window_bounds = array<i64: 8, 128>}]} {
    %c0_i32 = arith.constant 0 : i32
    %0 = arith.cmpi eq, %arg1, %c0_i32 : i32
    %1 = arith.extui %0 : i1 to i32
    %c0_i32_0 = arith.constant 0 : i32
    %2 = arith.cmpi ne, %1, %c0_i32_0 : i32
    scf.if %2 {
      %cst_19 = arith.constant 0.000000e+00 : f32
      %30 = vector.broadcast %cst_19 : f32 to vector<8x128xf32>
      %c0_20 = arith.constant 0 : index
      %c0_21 = arith.constant 0 : index
      %31 = vector.load %arg8[%c0_20, %c0_21] : memref<8x128xf32, #tpu.memory_space<vmem>>, vector<8x128xf32>
      tpu.vector_store %arg8[%c0_20, %c0_21], %30 {strides = array<i32>} : memref<8x128xf32, #tpu.memory_space<vmem>>, vector<8x128xf32>,
    } else {
    }
    %c0 = arith.constant 0 : index
    %c0_1 = arith.constant 0 : index
    %3 = vector.load %arg2[%c0, %c0_1] : memref<8x128xf32, #tpu.memory_space<vmem>>, vector<8x128xf32>
    %c0_2 = arith.constant 0 : index
    %c0_3 = arith.constant 0 : index
    %4 = vector.load %arg3[%c0_2, %c0_3] : memref<128x128xf32, #tpu.memory_space<vmem>>, vector<128x128xf32>
    %cst = arith.constant dense<0.000000e+00> : vector<8x128xf32>
    %5 = tpu.matmul %3, %4, %cst {dimension_numbers = #tpu.dot_dimension_numbers<[1], [0], [0], [1], [0, 0, 1, 1], [], []>} : vector<8x128xf32>, vector<128x128xf32>, vector<8x128xf32> -> vector<8x128xf32>
    %c0_4 = arith.constant 0 : index
    %c0_5 = arith.constant 0 : index
    %6 = vector.load %arg4[%c0_4, %c0_5] : memref<1x128xf32, #tpu.memory_space<vmem>>, vector<1x128xf32>
    %7 = vector.broadcast %6 : vector<1x128xf32> to vector<8x128xf32>
    %8 = arith.addf %5, %7 : vector<8x128xf32>
    %cst_6 = arith.constant 5.000000e-01 : f32
    %9 = vector.broadcast %cst_6 : f32 to vector<8x128xf32>
    %10 = arith.mulf %9, %8 : vector<8x128xf32>
    %11 = arith.mulf %8, %8 : vector<8x128xf32>
    %cst_7 = arith.constant 4.471500e-02 : f32
    %12 = vector.broadcast %cst_7 : f32 to vector<8x128xf32>
    %13 = arith.mulf %12, %11 : vector<8x128xf32>
    %14 = arith.mulf %13, %8 : vector<8x128xf32>
    %15 = arith.addf %8, %14 : vector<8x128xf32>
    %cst_8 = arith.constant 0.797884583 : f32
    %16 = vector.broadcast %cst_8 : f32 to vector<8x128xf32>
    %17 = arith.mulf %16, %15 : vector<8x128xf32>
    %18 = math.tanh %17 : vector<8x128xf32>
    %cst_9 = arith.constant 1.000000e+00 : f32
    %19 = vector.broadcast %cst_9 : f32 to vector<8x128xf32>
    %20 = arith.addf %19, %18 : vector<8x128xf32>
    %21 = arith.mulf %10, %20 : vector<8x128xf32>
    %c0_10 = arith.constant 0 : index
    %c0_11 = arith.constant 0 : index
    %22 = vector.load %arg8[%c0_10, %c0_11] : memref<8x128xf32, #tpu.memory_space<vmem>>, vector<8x128xf32>
    %c0_12 = arith.constant 0 : index
    %c0_13 = arith.constant 0 : index
    %23 = vector.load %arg5[%c0_12, %c0_13] : memref<128x128xf32, #tpu.memory_space<vmem>>, vector<128x128xf32>
    %cst_14 = arith.constant dense<0.000000e+00> : vector<8x128xf32>
    %24 = tpu.matmul %21, %23, %cst_14 {dimension_numbers = #tpu.dot_dimension_numbers<[1], [0], [0], [1], [0, 0, 1, 1], [], []>} : vector<8x128xf32>, vector<128x128xf32>, vector<8x128xf32> -> vector<8x128xf32>
    %25 = arith.addf %22, %24 : vector<8x128xf32>
    %c0_15 = arith.constant 0 : index
    %c0_16 = arith.constant 0 : index
    %26 = vector.load %arg8[%c0_15, %c0_16] : memref<8x128xf32, #tpu.memory_space<vmem>>, vector<8x128xf32>
    tpu.vector_store %arg8[%c0_15, %c0_16], %25 {strides = array<i32>} : memref<8x128xf32, #tpu.memory_space<vmem>>, vector<8x128xf32>,
    %c0_i32_17 = arith.constant 0 : i32
    %27 = arith.cmpi eq, %arg1, %c0_i32_17 : i32
    %28 = arith.extui %27 : i1 to i32
    %c0_i32_18 = arith.constant 0 : i32
    %29 = arith.cmpi ne, %28, %c0_i32_18 : i32
    scf.if %29 {
      %c0_19 = arith.constant 0 : index
      %c0_20 = arith.constant 0 : index
      %30 = vector.load %arg8[%c0_19, %c0_20] : memref<8x128xf32, #tpu.memory_space<vmem>>, vector<8x128xf32>
      %c0_21 = arith.constant 0 : index
      %c0_22 = arith.constant 0 : index
      %31 = vector.load %arg6[%c0_21, %c0_22] : memref<1x128xf32, #tpu.memory_space<vmem>>, vector<1x128xf32>
      %32 = vector.broadcast %31 : vector<1x128xf32> to vector<8x128xf32>
      %33 = arith.addf %30, %32 : vector<8x128xf32>
      %c0_23 = arith.constant 0 : index
      %c0_24 = arith.constant 0 : index
      %34 = vector.load %arg7[%c0_23, %c0_24] : memref<8x128xf32, #tpu.memory_space<vmem>>, vector<8x128xf32>
      tpu.vector_store %arg7[%c0_23, %c0_24], %33 {strides = array<i32>} : memref<8x128xf32, #tpu.memory_space<vmem>>, vector<8x128xf32>,
    } else {
    }
    return
  }
  func.func @transform_0(%arg0: i32, %arg1: i32) -> (i32, i32) {
    %c0_i32 = arith.constant 0 : i32
    %c0_i32_0 = arith.constant 0 : i32
    return %arg0, %c0_i32 : i32, i32
  }
  func.func @transform_1(%arg0: i32, %arg1: i32) -> (i32, i32) {
    %c0_i32 = arith.constant 0 : i32
    %c0_i32_0 = arith.constant 0 : i32
    return %c0_i32, %arg1 : i32, i32
  }
  func.func @transform_2(%arg0: i32, %arg1: i32) -> (i32, i32) {
    %c0_i32 = arith.constant 0 : i32
    %c0_i32_0 = arith.constant 0 : i32
    return %c0_i32, %arg1 : i32, i32
  }
  func.func @transform_3(%arg0: i32, %arg1: i32) -> (i32, i32) {
    %c0_i32 = arith.constant 0 : i32
    %c0_i32_0 = arith.constant 0 : i32
    return %arg1, %c0_i32 : i32, i32
  }
  func.func @transform_4(%arg0: i32, %arg1: i32) -> (i32, i32) {
    %c0_i32 = arith.constant 0 : i32
    %c0_i32_0 = arith.constant 0 : i32
    %c0_i32_1 = arith.constant 0 : i32
    return %c0_i32, %c0_i32_0 : i32, i32
  }
  func.func @transform_5(%arg0: i32, %arg1: i32) -> (i32, i32) {
    %c0_i32 = arith.constant 0 : i32
    %c0_i32_0 = arith.constant 0 : i32
    return %arg0, %c0_i32 : i32, i32
  }
}

</mosaic_0001>

<llo_original>
// kernel: feed_forward.1
$region0: #{feed_forward.1}
  #allocation0 [shape = 'u32[]', space=smem, size = 0x4, offset = 0x4, fixed_abs, tag = 'smem constant byte address 0x4 - core index']
  #allocation1 [shape = 'u32[72,128]{1,0:T(1,128)}', space=vmem, size = 0x9000, scoped, tag = 'internal scratch']
  #allocation2 [shape = 'f32[8,128]{1,0:T(8,128)}', space=vmem, size = 0x1000, scoped, tag = 'scratch operand']
  %s0 = inlined_call_operand.vmem [shape: f32[16,128], index: 0, kind: input, shape index: {}]
  %s1 = inlined_call_operand.vmem [shape: f32[128,128], index: 1, kind: input, shape index: {}]
  %s2 = inlined_call_operand.vmem [shape: f32[1,128], index: 2, kind: input, shape index: {}]
  %s3 = inlined_call_operand.vmem [shape: f32[128,128], index: 3, kind: input, shape index: {}]
  %s4 = inlined_call_operand.vmem [shape: f32[1,128], index: 4, kind: input, shape index: {}]
  %s5 = inlined_call_operand.vmem [shape: f32[16,128], index: 5, kind: output, shape index: {}]
  %s6 = sld [smem:[#allocation0]]
  $region61: #{feed_forward.1} parent=0
    _
  %s8 = ssub.s32 1, %s6
  %s9 = scalar_select 0, %s8, %s6
  loop: start=0, step=1, limit=4
  $region2: #{feed_forward.1} parent=0 // loop_pre_header
    _
  $region3: #{feed_forward.1} parent=0 // loop_header
    %s11 = sphi 0, %s15
    %p12 = scmp.ge.s32.totalorder %s11, 4
    %s18 = sphi 0, %s30
    %s19 = sphi 0, %s26
    %s20 = sphi 0, %s18
    %s21 = sphi 0, %s19
    %s22 = sphi 0, %s20
    %s23 = sphi 0, %s21
    %s33 = sphi 0, %s35
    %s36 = sphi 0, %s33
    %s37 = sphi 0, %s36
    %s53 = sphi 0, %s37
    %s59 = sphi 0, %s61
    %s62 = sphi 0, %s59
    %s63 = sphi 0, %s62
    %s79 = sphi 0, %s63
    %s85 = sphi 0, %s87
    %s88 = sphi 0, %s85
    %s89 = sphi 0, %s88
    %s105 = sphi 0, %s89
    %s111 = sphi 0, %s113
    %s114 = sphi 0, %s111
    %s115 = sphi 0, %s114
    %s131 = sphi 0, %s115
    %s135 = sphi 0, %s135
    %s137 = sphi 0, %s135
    %s138 = sphi 0, %s137
    %s152 = sphi 0, %s138
    %s158 = sphi 0, %s160
    %s161 = sphi 0, %s158
    %s162 = sphi 0, %s161
    %s178 = sphi 0, %s162
  $region4: #{feed_forward.1} parent=0 // loop_header_branch
    %14 = sbr.rel (%p12) target = $region8
  $region5: #{feed_forward.1} parent=0 // loop_body
    %s16 = ssub.s32 %s11, 1
    %s17 = ssub.s32 %s11, 2
    %s24 = sadd.s32 1, %s19
    %p25 = scmp.ge.s32.totalorder %s24, 1
    %s26 = scalar_select %p25, 0, %s24
    %s27 = sadd.s32 1, %s18
    %s28 = scalar_select %p25, %s27, %s18
    %p29 = scmp.ge.s32.totalorder %s28, 2
    %s30 = scalar_select %p29, 0, %s28
    %s31 = ssub.s32 %s18, %s30
    %p32 = scmp.eq.s32.totalorder %s31, 0
    %s34 = sadd.s32 %s33, 1
    %s35 = scalar_select %p32, %s33, %s34
    %p38 = pneg %p32
    %p39 = scmp.eq.s32.totalorder %s11, 1
    %p40 = por %p38, %p39
    %p41 = scmp.ne.s32.totalorder %s33, %s36
    %p42 = scmp.eq.s32.totalorder %s11, 0
    %p43 = por %p41, %p42
    %p44 = scmp.ne.s32.totalorder %s33, %s36
    %p45 = scmp.eq.s32.totalorder %s16, 1
    %p46 = por %p44, %p45
    %p47 = scmp.ne.s32.totalorder %s36, %s37
    %p48 = scmp.eq.s32.totalorder %s16, 0
    %p49 = por %p47, %p48
    %p50 = scmp.ne.s32.totalorder %s36, %s37
    %p51 = scmp.eq.s32.totalorder %s17, 1
    %p52 = por %p50, %p51
    %p54 = scmp.ne.s32.totalorder %s37, %s53
    %p55 = scmp.eq.s32.totalorder %s17, 0
    %p56 = por %p54, %p55
    %s57 = ssub.s32 %s19, %s26
    %p58 = scmp.eq.s32.totalorder %s57, 0
    %s60 = sadd.s32 %s59, 1
    %s61 = scalar_select %p58, %s59, %s60
    %p64 = pneg %p58
    %p65 = scmp.eq.s32.totalorder %s11, 1
    %p66 = por %p64, %p65
    %p67 = scmp.ne.s32.totalorder %s59, %s62
    %p68 = scmp.eq.s32.totalorder %s11, 0
    %p69 = por %p67, %p68
    %p70 = scmp.ne.s32.totalorder %s59, %s62
    %p71 = scmp.eq.s32.totalorder %s16, 1
    %p72 = por %p70, %p71
    %p73 = scmp.ne.s32.totalorder %s62, %s63
    %p74 = scmp.eq.s32.totalorder %s16, 0
    %p75 = por %p73, %p74
    %p76 = scmp.ne.s32.totalorder %s62, %s63
    %p77 = scmp.eq.s32.totalorder %s17, 1
    %p78 = por %p76, %p77
    %p80 = scmp.ne.s32.totalorder %s63, %s79
    %p81 = scmp.eq.s32.totalorder %s17, 0
    %p82 = por %p80, %p81
    %s83 = ssub.s32 %s19, %s26
    %p84 = scmp.eq.s32.totalorder %s83, 0
    %s86 = sadd.s32 %s85, 1
    %s87 = scalar_select %p84, %s85, %s86
    %p90 = pneg %p84
    %p91 = scmp.eq.s32.totalorder %s11, 1
    %p92 = por %p90, %p91
    %p93 = scmp.ne.s32.totalorder %s85, %s88
    %p94 = scmp.eq.s32.totalorder %s11, 0
    %p95 = por %p93, %p94
    %p96 = scmp.ne.s32.totalorder %s85, %s88
    %p97 = scmp.eq.s32.totalorder %s16, 1
    %p98 = por %p96, %p97
    %p99 = scmp.ne.s32.totalorder %s88, %s89
    %p100 = scmp.eq.s32.totalorder %s16, 0
    %p101 = por %p99, %p100
    %p102 = scmp.ne.s32.totalorder %s88, %s89
    %p103 = scmp.eq.s32.totalorder %s17, 1
    %p104 = por %p102, %p103
    %p106 = scmp.ne.s32.totalorder %s89, %s105
    %p107 = scmp.eq.s32.totalorder %s17, 0
    %p108 = por %p106, %p107
    %s109 = ssub.s32 %s19, %s26
    %p110 = scmp.eq.s32.totalorder %s109, 0
    %s112 = sadd.s32 %s111, 1
    %s113 = scalar_select %p110, %s111, %s112
    %p116 = pneg %p110
    %p117 = scmp.eq.s32.totalorder %s11, 1
    %p118 = por %p116, %p117
    %p119 = scmp.ne.s32.totalorder %s111, %s114
    %p120 = scmp.eq.s32.totalorder %s11, 0
    %p121 = por %p119, %p120
    %p122 = scmp.ne.s32.totalorder %s111, %s114
    %p123 = scmp.eq.s32.totalorder %s16, 1
    %p124 = por %p122, %p123
    %p125 = scmp.ne.s32.totalorder %s114, %s115
    %p126 = scmp.eq.s32.totalorder %s16, 0
    %p127 = por %p125, %p126
    %p128 = scmp.ne.s32.totalorder %s114, %s115
    %p129 = scmp.eq.s32.totalorder %s17, 1
    %p130 = por %p128, %p129
    %p132 = scmp.ne.s32.totalorder %s115, %s131
    %p133 = scmp.eq.s32.totalorder %s17, 0
    %p134 = por %p132, %p133
    %s136 = sadd.s32 %s135, 1
    %p139 = scmp.eq.s32.totalorder %s11, 1
    %p140 = scmp.ne.s32.totalorder %s135, %s137
    %p141 = scmp.eq.s32.totalorder %s11, 0
    %p142 = por %p140, %p141
    %p143 = scmp.ne.s32.totalorder %s135, %s137
    %p144 = scmp.eq.s32.totalorder %s16, 1
    %p145 = por %p143, %p144
    %p146 = scmp.ne.s32.totalorder %s137, %s138
    %p147 = scmp.eq.s32.totalorder %s16, 0
    %p148 = por %p146, %p147
    %p149 = scmp.ne.s32.totalorder %s137, %s138
    %p150 = scmp.eq.s32.totalorder %s17, 1
    %p151 = por %p149, %p150
    %p153 = scmp.ne.s32.totalorder %s138, %s152
    %p154 = scmp.eq.s32.totalorder %s17, 0
    %p155 = por %p153, %p154
    %s156 = ssub.s32 %s18, %s30
    %p157 = scmp.eq.s32.totalorder %s156, 0
    %s159 = sadd.s32 %s158, 1
    %s160 = scalar_select %p157, %s158, %s159
    %p163 = pneg %p157
    %p164 = scmp.eq.s32.totalorder %s11, 1
    %p165 = por %p163, %p164
    %p166 = scmp.ne.s32.totalorder %s158, %s161
    %p167 = scmp.eq.s32.totalorder %s11, 0
    %p168 = por %p166, %p167
    %p169 = scmp.ne.s32.totalorder %s158, %s161
    %p170 = scmp.eq.s32.totalorder %s16, 1
    %p171 = por %p169, %p170
    %p172 = scmp.ne.s32.totalorder %s161, %s162
    %p173 = scmp.eq.s32.totalorder %s16, 0
    %p174 = por %p172, %p173
    %p175 = scmp.ne.s32.totalorder %s161, %s162
    %p176 = scmp.eq.s32.totalorder %s17, 1
    %p177 = por %p175, %p176
    %p179 = scmp.ne.s32.totalorder %s162, %s178
    %p180 = scmp.eq.s32.totalorder %s17, 0
    %p181 = por %p179, %p180
    %p182 = scmp.le.s32.totalorder 1, %s11
    %p183 = scmp.lt.s32.totalorder %s11, 3
    %p184 = pnand %p182, %p183
    %p185 = pneg %p184
    // Predicated region
    $region9: #{feed_forward.1} parent=5 // pred_check
      _
    $region10: #{feed_forward.1} parent=5 // pred_check_branch
      %187 = sbr.rel (%p184) target = $region12
    $region11: #{feed_forward.1} parent=5 // pred_region
      %s188 = ssub.s32 %s11, 1
      // Predicated region
      $region13: #{feed_forward.1} parent=11 // pred_check
        %p189 = pneg %p75
      $region14: #{feed_forward.1} parent=11 // pred_check_branch
        %191 = sbr.rel (%p189) target = $region16
      $region15: #{feed_forward.1} parent=11 // pred_region
        %p192 = scmp.lt.s32.totalorder %s21, 0
        %s193 = scalar_select %p192, %s21, 0
        %s194 = smul.addr %s193, 8
        %s195 = scalar_lea.vmem %s1, %s194
      $region16: #{feed_forward.1} parent=11 // pred_fallthru
        _
      // Predicated region
      $region17: #{feed_forward.1} parent=11 // pred_check
        %p196 = pneg %p101
      $region18: #{feed_forward.1} parent=11 // pred_check_branch
        %198 = sbr.rel (%p196) target = $region20
      $region19: #{feed_forward.1} parent=11 // pred_region
        %p199 = scmp.lt.s32.totalorder %s21, 0
        %s200 = scalar_select %p199, %s21, 0
        %s201 = scalar_lea.vmem %s2, %s200
      $region20: #{feed_forward.1} parent=11 // pred_fallthru
        _
      // Predicated region
      $region21: #{feed_forward.1} parent=11 // pred_check
        %p202 = pneg %p127
      $region22: #{feed_forward.1} parent=11 // pred_check_branch
        %204 = sbr.rel (%p202) target = $region24
      $region23: #{feed_forward.1} parent=11 // pred_region
        %s205 = smul.u32 16, %s21
        %p206 = scmp.lt.s32.totalorder %s205, 15
        %s207 = scalar_select %p206, %s205, 15
        %s208 = smul.addr %s207, 8
        %s209 = scalar_lea.vmem %s3, %s208
        %s210 = smul.u32 16, %s21
      $region24: #{feed_forward.1} parent=11 // pred_fallthru
        _
      // Predicated region
      $region25: #{feed_forward.1} parent=11 // pred_check
        %p211 = pneg %p148
      $region26: #{feed_forward.1} parent=11 // pred_check_branch
        %213 = sbr.rel (%p211) target = $region28
      $region27: #{feed_forward.1} parent=11 // pred_region
        _
      $region28: #{feed_forward.1} parent=11 // pred_fallthru
        _
    $region12: #{feed_forward.1} parent=5 // pred_fallthru
      _
    %p214 = scmp.lt.s32.totalorder %s11, 2
    // Predicated region
    $region29: #{feed_forward.1} parent=5 // pred_check
      %p215 = pneg %p214
    $region30: #{feed_forward.1} parent=5 // pred_check_branch
      %217 = sbr.rel (%p215) target = $region32
    $region31: #{feed_forward.1} parent=5 // pred_region
      // Predicated region
      $region33: #{feed_forward.1} parent=31 // pred_check
        %p218 = pneg %p43
      $region34: #{feed_forward.1} parent=31 // pred_check_branch
        %220 = sbr.rel (%p218) target = $region36
      $region35: #{feed_forward.1} parent=31 // pred_region
        %p221 = scmp.lt.s32.totalorder %s18, 1
        %s222 = scalar_select %p221, %s18, 1
        %s223 = smul.addr %s222, 8
        %s224 = scalar_lea.vmem %s0, %s223
      $region36: #{feed_forward.1} parent=31 // pred_fallthru
        _
    $region32: #{feed_forward.1} parent=5 // pred_fallthru
      _
    %p225 = scmp.le.s32.totalorder 1, %s11
    %p226 = scmp.lt.s32.totalorder %s11, 3
    %p227 = pnand %p225, %p226
    %p228 = pneg %p227
    // Predicated region
    $region37: #{feed_forward.1} parent=5 // pred_check
      _
    $region38: #{feed_forward.1} parent=5 // pred_check_branch
      %230 = sbr.rel (%p227) target = $region40
    $region39: #{feed_forward.1} parent=5 // pred_region
      %s231 = ssub.s32 %s11, 1
      %p232 = scmp.lt.s32.totalorder %s20, 1
      %s233 = scalar_select %p232, %s20, 1
      %s234 = smul.addr %s233, 8
      %s235 = scalar_lea.vmem %s0, %s234
      %p236 = pneg %p49
      %p237 = pneg %p46
      %p238 = scmp.lt.s32.totalorder %s21, 0
      %s239 = scalar_select %p238, %s21, 0
      %s240 = smul.addr %s239, 8
      %s241 = scalar_lea.vmem %s1, %s240
      %p242 = pneg %p75
      %p243 = pneg %p72
      %p244 = scmp.lt.s32.totalorder %s21, 0
      %s245 = scalar_select %p244, %s21, 0
      %s246 = scalar_lea.vmem %s2, %s245
      %p247 = pneg %p101
      %p248 = pneg %p98
      %s249 = smul.u32 16, %s21
      %p250 = scmp.lt.s32.totalorder %s249, 15
      %s251 = scalar_select %p250, %s249, 15
      %s252 = smul.addr %s251, 8
      %s253 = scalar_lea.vmem %s3, %s252
      %p254 = pneg %p127
      %p255 = pneg %p124
      %p256 = pneg %p148
      %p257 = pneg %p145
      %p258 = pneg %p174
      %p259 = pneg %p171
      %p260 = scmp.lt.s32.totalorder %s20, 1
      %s261 = scalar_select %p260, %s20, 1
      %s262 = smul.addr %s261, 8
      %s263 = scalar_lea.vmem %s5, %s262
      %p264 = scmp.lt.s32.totalorder %s20, 1
      %s265 = scalar_select %p264, %s20, 1
      %s266 = smul.addr %s265, 8
      %s267 = scalar_lea.vmem %s0, %s266
      %p268 = scmp.lt.s32.totalorder %s21, 0
      %s269 = scalar_select %p268, %s21, 0
      %s270 = smul.addr %s269, 8
      %s271 = scalar_lea.vmem %s1, %s270
      %p272 = scmp.lt.s32.totalorder %s21, 0
      %s273 = scalar_select %p272, %s21, 0
      %s274 = scalar_lea.vmem %s2, %s273
      %s275 = smul.u32 16, %s21
      %p276 = scmp.lt.s32.totalorder %s275, 15
      %s277 = scalar_select %p276, %s275, 15
      %s278 = smul.addr %s277, 8
      %s279 = scalar_lea.vmem %s3, %s278
      %s280 = smul.u32 16, %s21
      %p281 = scmp.lt.s32.totalorder %s20, 1
      %s282 = scalar_select %p281, %s20, 1
      %s283 = smul.addr %s282, 8
      %s284 = scalar_lea.vmem %s5, %s283
      %p285 = scmp.eq.s32.totalorder %s21, 0
      // Predicated region
      $region41: #{feed_forward.1} parent=39 // pred_check
        %p286 = pneg %p285
      $region42: #{feed_forward.1} parent=39 // pred_check_branch
        %288 = sbr.rel (%p286) target = $region44
      $region43: #{feed_forward.1} parent=39 // pred_region
        %289 = vst [vmem:[#allocation2] sm:$0xff] 0.0
      $region44: #{feed_forward.1} parent=39 // pred_fallthru
        _
      %v290 = vld [vmem:[%s267] sm:$0xff]
      %v291 = vld [vmem:[%s271] sm:$0xff]
      %v292 = vld [vmem:[%s271 + $0x8] sm:$0xff]
      %v293 = vld [vmem:[%s271 + $0x10] sm:$0xff]
      %v294 = vld [vmem:[%s271 + $0x18] sm:$0xff]
      %v295 = vld [vmem:[%s271 + $0x20] sm:$0xff]
      %v296 = vld [vmem:[%s271 + $0x28] sm:$0xff]
      %v297 = vld [vmem:[%s271 + $0x30] sm:$0xff]
      %v298 = vld [vmem:[%s271 + $0x38] sm:$0xff]
      %v299 = vld [vmem:[%s271 + $0x40] sm:$0xff]
      %v300 = vld [vmem:[%s271 + $0x48] sm:$0xff]
      %v301 = vld [vmem:[%s271 + $0x50] sm:$0xff]
      %v302 = vld [vmem:[%s271 + $0x58] sm:$0xff]
      %v303 = vld [vmem:[%s271 + $0x60] sm:$0xff]
      %v304 = vld [vmem:[%s271 + $0x68] sm:$0xff]
      %v305 = vld [vmem:[%s271 + $0x70] sm:$0xff]
      %v306 = vld [vmem:[%s271 + $0x78] sm:$0xff]
      %v307 = vld [vmem:[%s274] sm:$0x1]
      %v309 = vperm.slane %v307, 0
      %311 = vmatpush.msra.mxu0 %v306
      %312 = vmatpush.msra.mxu0 %v305
      %313 = vmatpush.msra.mxu0 %v304
      %314 = vmatpush.msra.mxu0 %v303
      %315 = vmatpush.msra.mxu0 %v302
      %316 = vmatpush.msra.mxu0 %v301
      %317 = vmatpush.msra.mxu0 %v300
      %318 = vmatpush.msra.mxu0 %v299
      %319 = vmatpush.msra.mxu0 %v298
      %320 = vmatpush.msra.mxu0 %v297
      %321 = vmatpush.msra.mxu0 %v296
      %322 = vmatpush.msra.mxu0 %v295
      %323 = vmatpush.msra.mxu0 %v294
      %324 = vmatpush.msra.mxu0 %v293
      %325 = vmatpush.msra.mxu0 %v292
      %326 = vmatpush.msra.mxu0 %v291
      %327 = vmatmul.f32.gmra.mxu0 %v290
      %v328 = vpop.f32.mrf.mxu0
      %v329 = vadd.f32 %v309, %v328
      %330 = vdwg.mxu0
      %v331 = vmul.f32 %v329, 0.5
      %v332 = vmul.f32 %v329, %v329
      %v333 = vmul.f32 %v332, 0.044715
      %v334 = vmul.f32 %v333, %v329
      %v335 = vadd.f32 %v329, %v334
      %v336 = vmul.f32 %v335, 0.7978846
      %v337 = vtanh.pop %v336
      %v338 = vadd.f32 %v337, 1.0
      %v339 = vmul.f32 %v331, %v338
      %v340 = vld [vmem:[#allocation2] sm:$0xff]
      %v341 = vld [vmem:[%s279] sm:$0xff]
      %v342 = vld [vmem:[%s279 + $0x8] sm:$0xff]
      %v343 = vld [vmem:[%s279 + $0x10] sm:$0xff]
      %v344 = vld [vmem:[%s279 + $0x18] sm:$0xff]
      %v345 = vld [vmem:[%s279 + $0x20] sm:$0xff]
      %v346 = vld [vmem:[%s279 + $0x28] sm:$0xff]
      %v347 = vld [vmem:[%s279 + $0x30] sm:$0xff]
      %v348 = vld [vmem:[%s279 + $0x38] sm:$0xff]
      %v349 = vld [vmem:[%s279 + $0x40] sm:$0xff]
      %v350 = vld [vmem:[%s279 + $0x48] sm:$0xff]
      %v351 = vld [vmem:[%s279 + $0x50] sm:$0xff]
      %v352 = vld [vmem:[%s279 + $0x58] sm:$0xff]
      %v353 = vld [vmem:[%s279 + $0x60] sm:$0xff]
      %v354 = vld [vmem:[%s279 + $0x68] sm:$0xff]
      %v355 = vld [vmem:[%s279 + $0x70] sm:$0xff]
      %v356 = vld [vmem:[%s279 + $0x78] sm:$0xff]
      %357 = vmatpush.msra.mxu0 %v356
      %358 = vmatpush.msra.mxu0 %v355
      %359 = vmatpush.msra.mxu0 %v354
      %360 = vmatpush.msra.mxu0 %v353
      %361 = vmatpush.msra.mxu0 %v352
      %362 = vmatpush.msra.mxu0 %v351
      %363 = vmatpush.msra.mxu0 %v350
      %364 = vmatpush.msra.mxu0 %v349
      %365 = vmatpush.msra.mxu0 %v348
      %366 = vmatpush.msra.mxu0 %v347
      %367 = vmatpush.msra.mxu0 %v346
      %368 = vmatpush.msra.mxu0 %v345
      %369 = vmatpush.msra.mxu0 %v344
      %370 = vmatpush.msra.mxu0 %v343
      %371 = vmatpush.msra.mxu0 %v342
      %372 = vmatpush.msra.mxu0 %v341
      %373 = vmatmul.f32.gmra.mxu0 %v339
      %v374 = vpop.f32.mrf.mxu0
      %v375 = vadd.f32 0.0, %v374
      %376 = vdwg.mxu0
      %v377 = vadd.f32 %v340, %v375
      %378 = vst [vmem:[#allocation2] sm:$0xff] %v377
      // Predicated region
      $region45: #{feed_forward.1} parent=39 // pred_check
        %p379 = pneg %p285
      $region46: #{feed_forward.1} parent=39 // pred_check_branch
        %381 = sbr.rel (%p379) target = $region48
      $region47: #{feed_forward.1} parent=39 // pred_region
        %v382 = vld [vmem:[#allocation2] sm:$0xff]
        %v383 = vld [vmem:[%s4] sm:$0x1]
        %v385 = vperm.slane %v383, 0
        %v387 = vadd.f32 %v382, %v385
        %388 = vst [vmem:[%s284] sm:$0xff] %v387
      $region48: #{feed_forward.1} parent=39 // pred_fallthru
        _
      %p389 = scmp.lt.s32.totalorder %s20, 1
      %s390 = scalar_select %p389, %s20, 1
      %s391 = smul.addr %s390, 8
      %s392 = scalar_lea.vmem %s5, %s391
      // Predicated region
      $region49: #{feed_forward.1} parent=39 // pred_check
        %p393 = pneg %p171
      $region50: #{feed_forward.1} parent=39 // pred_check_branch
        %395 = sbr.rel (%p393) target = $region52
      $region51: #{feed_forward.1} parent=39 // pred_region
        _
      $region52: #{feed_forward.1} parent=39 // pred_fallthru
        _
    $region40: #{feed_forward.1} parent=5 // pred_fallthru
      _
    %p396 = scmp.le.s32.totalorder 2, %s11
    // Predicated region
    $region53: #{feed_forward.1} parent=5 // pred_check
      %p397 = pneg %p396
    $region54: #{feed_forward.1} parent=5 // pred_check_branch
      %399 = sbr.rel (%p397) target = $region56
    $region55: #{feed_forward.1} parent=5 // pred_region
      %s400 = ssub.s32 %s11, 2
      // Predicated region
      $region57: #{feed_forward.1} parent=55 // pred_check
        %p401 = pneg %p177
      $region58: #{feed_forward.1} parent=55 // pred_check_branch
        %403 = sbr.rel (%p401) target = $region60
      $region59: #{feed_forward.1} parent=55 // pred_region
        %p404 = scmp.lt.s32.totalorder %s22, 1
        %s405 = scalar_select %p404, %s22, 1
        %s406 = smul.addr %s405, 8
        %s407 = scalar_lea.vmem %s5, %s406
      $region60: #{feed_forward.1} parent=55 // pred_fallthru
        _
    $region56: #{feed_forward.1} parent=5 // pred_fallthru
      _
  $region6: #{feed_forward.1} parent=0 // loop_footer
    %s15 = sadd.s32 1, %s11
  $region7: #{feed_forward.1} parent=0 // loop_footer_branch
    %10 = sbr.rel target = $region3
  $region8: #{feed_forward.1} parent=0 // loop_exit
    _

</llo_original>
